<compile_context>
chip_gen: v7x
topology: tpu7x:2x2x1
jax: 0.10.0
libtpu: 0.0.40
codegen_flags: <defaults>
</compile_context>

<pallas_src>
import functools

import jax
import jax.numpy as jnp
from jax.experimental import pallas as pl
from jax.experimental.pallas import tpu as pltpu


def _round_up(n, m):
    return ((n + m - 1) // m) * m


def _pick_divisor_tile(dim, candidates):
    """Largest candidate that evenly divides `dim`; else the full dim."""
    for c in candidates:
        if c <= dim and dim % c == 0:
            return c
    return dim


def _linear_kernel(x_ref, w_ref, b_ref, o_ref, acc_ref):
    # grid = (m, n, k); K is innermost / "arbitrary" so acc_ref is a valid
    # per-(m,n)-tile accumulator (output block index constant across k).
    k = pl.program_id(2)

    @pl.when(k == 0)
    def _init():
        acc_ref[...] = jnp.zeros_like(acc_ref)

    # (tm, tk) @ (tk, tn) -> (tm, tn), f32 accumulation on the MXU.
    acc_ref[...] += jnp.dot(x_ref[...], w_ref[...],
                            preferred_element_type=jnp.float32)

    @pl.when(k == pl.num_programs(2) - 1)
    def _finalize():
        # Bias add stays in f32 (VPU), then cast to the output dtype.
        o_ref[...] = (acc_ref[...] + b_ref[...]).astype(o_ref.dtype)


def prepare_params(weight, bias, compute_dtype=jnp.float32):
    """One-time parameter prep — call ONCE at init, not per forward call.

    Transposes the nn.Linear weight to (in_dim, out_p) for a standard
    (tm,tk)@(tk,tn) MXU contraction and lane-pads out_dim to a multiple of 128
    (lane-dense, unmasked stores). Cast to `compute_dtype` (bf16 for MXU-native
    throughput on v5e/v6e/v7x, f32 to match PyTorch numerics exactly).
    """
    out_dim, in_dim = weight.shape
    out_p = max(128, _round_up(out_dim, 128))
    w_t = jnp.pad(weight.astype(compute_dtype).T,
                  ((0, 0), (0, out_p - out_dim)))          # (in_dim, out_p)
    b_p = jnp.pad(bias.astype(jnp.float32),
                  (0, out_p - out_dim)).reshape(1, out_p)  # (1, out_p) f32
    return w_t, b_p


@functools.partial(jax.jit, static_argnames=("out_dim", "tm"))
def softmax_layer_forward(x, w_t, b_p, *, out_dim, tm=512):
    """Pallas equivalent of SoftmaxLayer.forward (i.e. nn.Linear).

    Args:
      x:     (batch, in_dim)  float32
      w_t:   (in_dim, out_p)  pre-transposed, lane-padded weight (prepare_params)
      b_p:   (1, out_p)       lane-padded f32 bias (prepare_params)
      out_dim: true (unpadded) number of output classes (static)
      tm:    batch tile (static)
    Returns:
      (batch, out_dim) float32 logits.
    """
    batch, in_dim = x.shape
    in_dim_w, out_p = w_t.shape
    assert in_dim_w == in_dim

    x = x.astype(w_t.dtype)  # no-op for f32; enables the bf16 compute path

    # --- tile choices -------------------------------------------------------
    # Batch: multiple of 8 sublanes; ragged last block handled by Pallas.
    tm_eff = min(tm, _round_up(batch, 8))
    grid_m = pl.cdiv(batch, tm_eff)
    # N: out_p is a multiple of 128; prefer 512/256 (2x256 MXU on v6e/v7x).
    tn = _pick_divisor_tile(out_p, (512, 256, 128))
    grid_n = out_p // tn
    # K: must divide in_dim exactly (reduction axis — no ragged garbage).
    tk = in_dim if in_dim <= 2048 else _pick_divisor_tile(
        in_dim, (2048, 1024, 512, 256, 128))
    grid_k = in_dim // tk

    itemsize = jnp.dtype(w_t.dtype).itemsize
    vmem_bytes = (2 * tm_eff * tk * itemsize    # x, double-buffered
                  + 2 * tk * tn * itemsize      # w, double-buffered
                  + 2 * tm_eff * tn * 4         # out (f32), double-buffered
                  + tm_eff * tn * 4             # acc scratch
                  + 2 * tn * 4)                 # bias
    vmem_limit = int(min(64 * 1024 * 1024,
                         max(2 * vmem_bytes, 16 * 1024 * 1024)))

    cost = pl.CostEstimate(
        flops=2 * batch * in_dim * out_p,
        transcendentals=0,
        bytes_accessed=(batch * in_dim * itemsize + in_dim * out_p * itemsize
                        + batch * out_p * 4 + out_p * 4))

    out = pl.pallas_call(
        _linear_kernel,
        out_shape=jax.ShapeDtypeStruct((batch, out_p), jnp.float32),
        grid_spec=pltpu.PrefetchScalarGridSpec(
            num_scalar_prefetch=0,
            grid=(grid_m, grid_n, grid_k),
            in_specs=[
                pl.BlockSpec((tm_eff, tk), lambda i, j, k: (i, k)),   # x
                pl.BlockSpec((tk, tn),     lambda i, j, k: (k, j)),   # w_t
                pl.BlockSpec((1, tn),      lambda i, j, k: (0, j)),   # bias
            ],
            out_specs=pl.BlockSpec((tm_eff, tn), lambda i, j, k: (i, j)),
            scratch_shapes=[pltpu.VMEM((tm_eff, tn), jnp.float32)],
        ),
        compiler_params=pltpu.CompilerParams(
            dimension_semantics=("parallel", "parallel", "arbitrary"),
            vmem_limit_bytes=vmem_limit),
        cost_estimate=cost,
    )(x, w_t, b_p)

    # NOTE: if downstream can consume padded logits (tiny out_dim), return
    # `out` directly and skip this slice copy.
    return out[:, :out_dim]


def init_linear_params(key, in_dim, out_dim):
    """Deterministic init matching nn.Linear's default (uniform +/- 1/sqrt(in_dim))."""
    k_w, k_b = jax.random.split(key)
    bound = 1.0 / (in_dim ** 0.5)
    weight = jax.random.uniform(
        k_w, (out_dim, in_dim), minval=-bound, maxval=bound, dtype=jnp.float32)
    bias = jax.random.uniform(
        k_b, (out_dim,), minval=-bound, maxval=bound, dtype=jnp.float32)
    return weight, bias


if __name__ == "__main__":
    key = jax.random.PRNGKey(0)
    k_x, k_p, k_x2 = jax.random.split(key, 3)

    # Small shapes consistent with the module's forward.
    batch, in_dim, out_dim = 8, 32, 16
    x = jax.random.normal(k_x, (batch, in_dim), dtype=jnp.float32)
    weight, bias = init_linear_params(k_p, in_dim, out_dim)
    ref = x @ weight.T + bias

    # One-time parameter prep (transpose + lane pad), hoisted out of the
    # per-call jitted path.
    w_t, b_p = prepare_params(weight, bias)

    out = jax.block_until_ready(
        softmax_layer_forward(x, w_t, b_p, out_dim=out_dim))
    assert out.shape == (batch, out_dim)
    assert jnp.allclose(out, ref, atol=1e-5, rtol=1e-5)

    # Non-tile-multiple batch exercises the ragged (unpadded) last block.
    batch2 = 260
    x2 = jax.random.normal(k_x2, (batch2, in_dim), dtype=jnp.float32)
    out2 = jax.block_until_ready(
        softmax_layer_forward(x2, w_t, b_p, out_dim=out_dim))
    ref2 = x2 @ weight.T + bias
    assert out2.shape == (batch2, out_dim)
    assert jnp.allclose(out2, ref2, atol=1e-5, rtol=1e-5)

    # bf16 compute path (MXU-native on v5e/v6e/v7x): looser tolerance.
    w_bf, b_bf = prepare_params(weight, bias, compute_dtype=jnp.bfloat16)
    out3 = jax.block_until_ready(
        softmax_layer_forward(x, w_bf, b_bf, out_dim=out_dim))
    assert out3.shape == (batch, out_dim)
    assert jnp.allclose(out3, ref, atol=5e-2, rtol=5e-2)

    print("KERNEL_OK")
</pallas_src>

<mosaic_0001>
module attributes {stable_mosaic.version = 11 : i64} {
  func.func @_linear_kernel(%arg0: i32, %arg1: i32, %arg2: i32, %arg3: memref<8x32xf32, #tpu.memory_space<vmem>>, %arg4: memref<32x128xf32, #tpu.memory_space<vmem>>, %arg5: memref<1x128xf32, #tpu.memory_space<vmem>>, %arg6: memref<8x128xf32, #tpu.memory_space<vmem>>, %arg7: memref<8x128xf32, #tpu.memory_space<vmem>>) attributes {dimension_semantics = [#tpu.dimension_semantics<parallel>, #tpu.dimension_semantics<parallel>, #tpu.dimension_semantics<arbitrary>], iteration_bounds = array<i64: 1, 1, 1>, scalar_prefetch = 0 : i64, scratch_operands = 1 : i64, tpu.core_type = #tpu.core_type<tc>, window_params = [{transform_indices = @transform_0, window_bounds = array<i64: 8, 32>}, {transform_indices = @transform_1, window_bounds = array<i64: 32, 128>}, {transform_indices = @transform_2, window_bounds = array<i64: 1, 128>}, {transform_indices = @transform_3, window_bounds = array<i64: 8, 128>}]} {
    %c0_i32 = arith.constant 0 : i32
    %0 = arith.cmpi eq, %arg2, %c0_i32 : i32
    %1 = arith.extui %0 : i1 to i32
    %c0_i32_0 = arith.constant 0 : i32
    %2 = arith.cmpi ne, %1, %c0_i32_0 : i32
    scf.if %2 {
      %cst_10 = arith.constant 0.000000e+00 : f32
      %12 = vector.broadcast %cst_10 : f32 to vector<8x128xf32>
      %c0_11 = arith.constant 0 : index
      %c0_12 = arith.constant 0 : index
      %13 = vector.load %arg7[%c0_11, %c0_12] : memref<8x128xf32, #tpu.memory_space<vmem>>, vector<8x128xf32>
      tpu.vector_store %arg7[%c0_11, %c0_12], %12 {strides = array<i32>} : memref<8x128xf32, #tpu.memory_space<vmem>>, vector<8x128xf32>,
    } else {
    }
    %c0 = arith.constant 0 : index
    %c0_1 = arith.constant 0 : index
    %3 = vector.load %arg7[%c0, %c0_1] : memref<8x128xf32, #tpu.memory_space<vmem>>, vector<8x128xf32>
    %c0_2 = arith.constant 0 : index
    %c0_3 = arith.constant 0 : index
    %4 = vector.load %arg3[%c0_2, %c0_3] : memref<8x32xf32, #tpu.memory_space<vmem>>, vector<8x32xf32>
    %c0_4 = arith.constant 0 : index
    %c0_5 = arith.constant 0 : index
    %5 = vector.load %arg4[%c0_4, %c0_5] : memref<32x128xf32, #tpu.memory_space<vmem>>, vector<32x128xf32>
    %cst = arith.constant dense<0.000000e+00> : vector<8x128xf32>
    %6 = tpu.matmul %4, %5, %cst {dimension_numbers = #tpu.dot_dimension_numbers<[1], [0], [0], [1], [0, 0, 1, 1], [], []>} : vector<8x32xf32>, vector<32x128xf32>, vector<8x128xf32> -> vector<8x128xf32>
    %7 = arith.addf %3, %6 : vector<8x128xf32>
    %c0_6 = arith.constant 0 : index
    %c0_7 = arith.constant 0 : index
    %8 = vector.load %arg7[%c0_6, %c0_7] : memref<8x128xf32, #tpu.memory_space<vmem>>, vector<8x128xf32>
    tpu.vector_store %arg7[%c0_6, %c0_7], %7 {strides = array<i32>} : memref<8x128xf32, #tpu.memory_space<vmem>>, vector<8x128xf32>,
    %c0_i32_8 = arith.constant 0 : i32
    %9 = arith.cmpi eq, %arg2, %c0_i32_8 : i32
    %10 = arith.extui %9 : i1 to i32
    %c0_i32_9 = arith.constant 0 : i32
    %11 = arith.cmpi ne, %10, %c0_i32_9 : i32
    scf.if %11 {
      %c0_10 = arith.constant 0 : index
      %c0_11 = arith.constant 0 : index
      %12 = vector.load %arg7[%c0_10, %c0_11] : memref<8x128xf32, #tpu.memory_space<vmem>>, vector<8x128xf32>
      %c0_12 = arith.constant 0 : index
      %c0_13 = arith.constant 0 : index
      %13 = vector.load %arg5[%c0_12, %c0_13] : memref<1x128xf32, #tpu.memory_space<vmem>>, vector<1x128xf32>
      %14 = vector.broadcast %13 : vector<1x128xf32> to vector<8x128xf32>
      %15 = arith.addf %12, %14 : vector<8x128xf32>
      %c0_14 = arith.constant 0 : index
      %c0_15 = arith.constant 0 : index
      %16 = vector.load %arg6[%c0_14, %c0_15] : memref<8x128xf32, #tpu.memory_space<vmem>>, vector<8x128xf32>
      tpu.vector_store %arg6[%c0_14, %c0_15], %15 {strides = array<i32>} : memref<8x128xf32, #tpu.memory_space<vmem>>, vector<8x128xf32>,
    } else {
    }
    return
  }
  func.func @transform_0(%arg0: i32, %arg1: i32, %arg2: i32) -> (i32, i32) {
    %c0_i32 = arith.constant 0 : i32
    return %arg0, %arg2 : i32, i32
  }
  func.func @transform_1(%arg0: i32, %arg1: i32, %arg2: i32) -> (i32, i32) {
    %c0_i32 = arith.constant 0 : i32
    return %arg2, %arg1 : i32, i32
  }
  func.func @transform_2(%arg0: i32, %arg1: i32, %arg2: i32) -> (i32, i32) {
    %c0_i32 = arith.constant 0 : i32
    %c0_i32_0 = arith.constant 0 : i32
    return %c0_i32, %arg1 : i32, i32
  }
  func.func @transform_3(%arg0: i32, %arg1: i32, %arg2: i32) -> (i32, i32) {
    %c0_i32 = arith.constant 0 : i32
    return %arg0, %arg1 : i32, i32
  }
}

</mosaic_0001>

<llo_original>
// kernel: softmax_layer_forward.1
$region0: #{softmax_layer_forward.1}
  #allocation0 [shape = 'u32[]', space=smem, size = 0x4, offset = 0x4, fixed_abs, tag = 'smem constant byte address 0x4 - core index']
  #allocation1 [shape = 'u32[144,128]{1,0:T(1,128)}', space=vmem, size = 0x12000, scoped, tag = 'internal scratch']
  #allocation2 [shape = 'f32[8,128]{1,0:T(8,128)}', space=vmem, size = 0x1000, scoped, tag = 'scratch operand']
  %s0 = inlined_call_operand.hbm [shape: f32[8,32], index: 0, kind: input, shape index: {}]
  %s1 = inlined_call_operand.hbm [shape: f32[32,128], index: 1, kind: input, shape index: {}]
  %s2 = inlined_call_operand.vmem [shape: f32[1,128], index: 2, kind: input, shape index: {}]
  %s3 = inlined_call_operand.hbm [shape: f32[8,128], index: 3, kind: output, shape index: {}]
  %s4 = sld [smem:[#allocation0]]
  $region38: #{softmax_layer_forward.1} parent=0
    _
  %s6 = ssub.s32 1, %s4
  %s7 = scalar_select 0, %s6, %s4
  $region1: #{softmax_layer_forward.1} parent=0
    #allocation3 [shape = 'u8[4096]{0}', space=vmem, size = 0x1000, scoped, tag = 'input window, operand 0, single buffered']
    #allocation4 [shape = 's32[1]{0}', space=sflag, size = 0x4, scoped, tag = 'scoped memory for softmax_layer_forward.1']
    #allocation5 [shape = 's32[1]{0}', space=sflag, size = 0x4, scoped, tag = 'scoped memory for softmax_layer_forward.1']
    #allocation6 [shape = 'u8[16384]{0}', space=vmem, size = 0x4000, scoped, tag = 'input window, operand 1, single buffered']
    #allocation7 [shape = 's32[1]{0}', space=sflag, size = 0x4, scoped, tag = 'scoped memory for softmax_layer_forward.1']
    #allocation8 [shape = 'u8[4096]{0}', space=vmem, size = 0x1000, scoped, tag = 'output window, operand 0, single buffered']
    %8 = vsyncpa [#allocation4], 0
    %9 = vsyncpa [#allocation7], 0
    %10 = vsyncpa [#allocation5], 0
    // Predicated region
    $region2: #{softmax_layer_forward.1} parent=1 // pred_check
      _
    $region3: #{softmax_layer_forward.1} parent=1 // pred_check_branch
      %12 = sbr.rel (0) target = $region5
    $region4: #{softmax_layer_forward.1} parent=1 // pred_region
      %s14 = ssub.s32 128, 128
      %15 = vsyncadd [#allocation4], %s14
      %s17 = sshll.u32 [#allocation3], 4
      %s18 = int_to_ptr.vmem [resolvable:$true] %s17
      %20 = dma.hbm_to_vmem [thread:$0]  %s0, 128, %s18, [#allocation4]
    $region5: #{softmax_layer_forward.1} parent=1 // pred_fallthru
      _
    // Predicated region
    $region6: #{softmax_layer_forward.1} parent=1 // pred_check
      _
    $region7: #{softmax_layer_forward.1} parent=1 // pred_check_branch
      %22 = sbr.rel (0) target = $region9
    $region8: #{softmax_layer_forward.1} parent=1 // pred_region
      %s24 = ssub.s32 512, 512
      %25 = vsyncadd [#allocation7], %s24
      %s26 = sshll.u32 [#allocation6], 4
      %s27 = int_to_ptr.vmem [resolvable:$true] %s26
      %32 = dma.hbm_to_vmem [thread:$0]  %s1, 512, %s27, [#allocation7], 128, 128, 8
    $region9: #{softmax_layer_forward.1} parent=1 // pred_fallthru
      _
    // Predicated region
    $region10: #{softmax_layer_forward.1} parent=1 // pred_check
      _
    $region11: #{softmax_layer_forward.1} parent=1 // pred_check_branch
      %34 = sbr.rel (0) target = $region13
    $region12: #{softmax_layer_forward.1} parent=1 // pred_region
      _
    $region13: #{softmax_layer_forward.1} parent=1 // pred_fallthru
      _
    // Predicated region
    $region14: #{softmax_layer_forward.1} parent=1 // pred_check
      _
    $region15: #{softmax_layer_forward.1} parent=1 // pred_check_branch
      %36 = sbr.rel (0) target = $region17
    $region16: #{softmax_layer_forward.1} parent=1 // pred_region
      %37 = dma.done [#allocation4], 128
    $region17: #{softmax_layer_forward.1} parent=1 // pred_fallthru
      _
    // Predicated region
    $region18: #{softmax_layer_forward.1} parent=1 // pred_check
      _
    $region19: #{softmax_layer_forward.1} parent=1 // pred_check_branch
      %39 = sbr.rel (0) target = $region21
    $region20: #{softmax_layer_forward.1} parent=1 // pred_region
      %40 = dma.done [#allocation7], 512
    $region21: #{softmax_layer_forward.1} parent=1 // pred_fallthru
      _
    %p41 = scmp.eq.s32.totalorder 0, 0
    // Predicated region
    $region22: #{softmax_layer_forward.1} parent=1 // pred_check
      %p42 = pneg %p41
    $region23: #{softmax_layer_forward.1} parent=1 // pred_check_branch
      %44 = sbr.rel (%p42) target = $region25
    $region24: #{softmax_layer_forward.1} parent=1 // pred_region
      %45 = vst [vmem:[#allocation2] sm:$0xff] 0.0
    $region25: #{softmax_layer_forward.1} parent=1 // pred_fallthru
      _
    %v46 = vld [vmem:[#allocation2] sm:$0xff]
    %v47 = vld [vmem:[#allocation3] sm:$0xff]
    %v48 = vld [vmem:[#allocation6] sm:$0xff]
    %v49 = vld [vmem:[#allocation6 + $0x8] sm:$0xff]
    %v50 = vld [vmem:[#allocation6 + $0x10] sm:$0xff]
    %v51 = vld [vmem:[#allocation6 + $0x18] sm:$0xff]
    %vm52 = vcmask 261120
    %v54 = vsel %vm52, %v47, 0
    %56 = vmatprep.subr.mxu0 0.0
    %57 = vmatpush1.msra.mxu0 %v48
    %58 = vmatprep.subr.mxu0 0.0
    %59 = vmatpush1.msra.mxu0 %v49
    %60 = vmatprep.subr.mxu0 0.0
    %61 = vmatpush1.msra.mxu0 %v50
    %62 = vmatprep.subr.mxu0 0.0
    %63 = vmatpush1.msra.mxu0 %v51
    %64 = vmatprep.subr.mxu0 0.0
    %65 = vmatpush1.msra.mxu0 0.0
    %66 = vmatprep.subr.mxu0 0.0
    %67 = vmatpush1.msra.mxu0 0.0
    %68 = vmatprep.subr.mxu0 0.0
    %69 = vmatpush1.msra.mxu0 0.0
    %70 = vmatprep.subr.mxu0 0.0
    %71 = vmatpush1.msra.mxu0 0.0
    %72 = vmatprep.subr.mxu0 0.0
    %73 = vmatpush1.msra.mxu0 0.0
    %74 = vmatprep.subr.mxu0 0.0
    %75 = vmatpush1.msra.mxu0 0.0
    %76 = vmatprep.subr.mxu0 0.0
    %77 = vmatpush1.msra.mxu0 0.0
    %78 = vmatprep.subr.mxu0 0.0
    %79 = vmatpush1.msra.mxu0 0.0
    %80 = vmatprep.subr.mxu0 0.0
    %81 = vmatpush1.msra.mxu0 0.0
    %82 = vmatprep.subr.mxu0 0.0
    %83 = vmatpush1.msra.mxu0 0.0
    %84 = vmatprep.subr.mxu0 0.0
    %85 = vmatpush1.msra.mxu0 0.0
    %86 = vmatprep.subr.mxu0 0.0
    %87 = vmatpush1.msra.mxu0 0.0
    %88 = vmatprep.subr.mxu0 0.0
    %89 = vmatpush1.msra.mxu0 0.0
    %90 = vmatprep.subr.mxu0 0.0
    %91 = vmatpush1.msra.mxu0 0.0
    %92 = vmatprep.subr.mxu0 0.0
    %93 = vmatpush1.msra.mxu0 0.0
    %94 = vmatprep.subr.mxu0 0.0
    %95 = vmatpush1.msra.mxu0 0.0
    %96 = vmatprep.subr.mxu0 0.0
    %97 = vmatpush1.msra.mxu0 0.0
    %98 = vmatprep.subr.mxu0 0.0
    %99 = vmatpush1.msra.mxu0 0.0
    %100 = vmatprep.subr.mxu0 0.0
    %101 = vmatpush1.msra.mxu0 0.0
    %102 = vmatprep.subr.mxu0 0.0
    %103 = vmatpush1.msra.mxu0 0.0
    %104 = vmatprep.subr.mxu0 0.0
    %105 = vmatpush1.msra.mxu0 0.0
    %106 = vmatprep.subr.mxu0 0.0
    %107 = vmatpush1.msra.mxu0 0.0
    %108 = vmatprep.subr.mxu0 0.0
    %109 = vmatpush1.msra.mxu0 0.0
    %110 = vmatprep.subr.mxu0 0.0
    %111 = vmatpush1.msra.mxu0 0.0
    %112 = vmatprep.subr.mxu0 0.0
    %113 = vmatpush1.msra.mxu0 0.0
    %114 = vmatprep.subr.mxu0 0.0
    %115 = vmatpush1.msra.mxu0 0.0
    %116 = vmatprep.subr.mxu0 0.0
    %117 = vmatpush1.msra.mxu0 0.0
    %118 = vmatprep.subr.mxu0 0.0
    %119 = vmatpush1.msra.mxu0 0.0
    %120 = vmatprep.mubr.f32.mxu0 0.0
    %121 = vmatmul.mubr.f32.gmra.mrb[0].mxu0 %v54
    %v122 = vpop.f32.mrb[0].mxu0
    %v123 = vadd.f32 0.0, %v122
    %v124 = vpop.f32.mrb[0].mxu0
    %125 = vdwg.mxu0
    %v126 = vadd.f32 %v46, %v123
    %127 = vst [vmem:[#allocation2] sm:$0xff] %v126
    // Predicated region
    $region26: #{softmax_layer_forward.1} parent=1 // pred_check
      %p128 = pneg %p41
    $region27: #{softmax_layer_forward.1} parent=1 // pred_check_branch
      %130 = sbr.rel (%p128) target = $region29
    $region28: #{softmax_layer_forward.1} parent=1 // pred_region
      %v131 = vld [vmem:[#allocation2] sm:$0xff]
      %v132 = vld [vmem:[%s2] sm:$0x1]
      %v134 = vlaneseq
      %v135 = vshrl.u32 %v134, 7
      %v136 = vsub.s32 0, %v135
      %v137 = vrot.slane %v132, %v136
      %v139 = vadd.f32 %v131, %v137
      %140 = vst [vmem:[#allocation8] sm:$0xff] %v139
    $region29: #{softmax_layer_forward.1} parent=1 // pred_fallthru
      _
    // Predicated region
    $region30: #{softmax_layer_forward.1} parent=1 // pred_check
      _
    $region31: #{softmax_layer_forward.1} parent=1 // pred_check_branch
      %142 = sbr.rel (0) target = $region33
    $region32: #{softmax_layer_forward.1} parent=1 // pred_region
      %s144 = ssub.s32 128, 128
      %145 = vsyncadd [#allocation5], %s144
      %s147 = sshll.u32 [#allocation8], 4
      %s148 = int_to_ptr.vmem [resolvable:$true] %s147
      %150 = dma.vmem_to_hbm [thread:$0]  %s148, 128, %s3, [#allocation5]
    $region33: #{softmax_layer_forward.1} parent=1 // pred_fallthru
      _
    // Predicated region
    $region34: #{softmax_layer_forward.1} parent=1 // pred_check
      _
    $region35: #{softmax_layer_forward.1} parent=1 // pred_check_branch
      %152 = sbr.rel (0) target = $region37
    $region36: #{softmax_layer_forward.1} parent=1 // pred_region
      %153 = dma.done [#allocation5], 128
    $region37: #{softmax_layer_forward.1} parent=1 // pred_fallthru
      _
    %154 = vsyncpa [#allocation4], 1
    %155 = vsyncpa [#allocation7], 1
    %156 = vsyncpa [#allocation5], 1

</llo_original>
